<compile_context>
chip_gen: v7x
topology: tpu7x:2x2x1
jax: 0.10.0
libtpu: 0.0.40
codegen_flags: <defaults>
</compile_context>

<pallas_src>
import functools
import math

import jax
import jax.numpy as jnp
from jax.experimental import pallas as pl
from jax.experimental.pallas import tpu as pltpu

EPS = 1e-5
LANE = 128


def _round_up(n, m):
    return (n + m - 1) // m * m


def _pad_axis(a, axis, target):
    if a.shape[axis] == target:
        return a
    widths = [(0, 0)] * a.ndim
    widths[axis] = (0, target - a.shape[axis])
    return jnp.pad(a, widths)


def _self_attn_kernel(x_ref, wq_ref, wkv_ref, wo_ref, o_ref, kv_ref,
                      *, d_model, dkp, tq, n_qt):
    # ---- K/V projection: computed once per batch element (query-tile 0) and
    #      kept resident in VMEM scratch across the query-tile axis. ----
    @pl.when(pl.program_id(1) == 0)
    def _():
        x_full = x_ref[0].astype(jnp.bfloat16)                      # (S, dmp)
        kv = jnp.dot(x_full, wkv_ref[...],
                     preferred_element_type=jnp.float32)            # (S, dkp+dvp)
        kv_ref[...] = kv.astype(kv_ref.dtype)

    # Query tile: sliced from the already-resident full-sequence block
    # (no separate query-tile DMA; x is read from HBM once per batch element).
    if n_qt == 1:
        x_q = x_ref[0]                                              # (tq, dmp) f32
    else:
        q_start = pl.multiple_of(pl.program_id(1) * tq, tq)
        x_q = x_ref[0, pl.ds(q_start, tq), :]                       # (tq, dmp) f32

    # Q projection (1/sqrt(d_k) already folded into wq by the wrapper).
    q = jnp.dot(x_q.astype(jnp.bfloat16), wq_ref[...],
                preferred_element_type=jnp.float32)                 # (tq, dkp)

    k = kv_ref[:, :dkp]                                             # (S, dkp) bf16
    v = kv_ref[:, dkp:]                                             # (S, dvp) bf16

    # Scores: contract the last axes directly (no k.T transpose on the XLU).
    s = jax.lax.dot_general(q.astype(jnp.bfloat16), k,
                            dimension_numbers=(((1,), (1,)), ((), ())),
                            preferred_element_type=jnp.float32)     # (tq, S)

    # Numerically stable softmax; reciprocal goes to the (otherwise idle) EUP.
    s = s - jnp.max(s, axis=-1, keepdims=True)
    p = jnp.exp(s)
    attn = p * pl.reciprocal(jnp.sum(p, axis=-1, keepdims=True), approx=True)

    ctx = jnp.dot(attn.astype(jnp.bfloat16), v,
                  preferred_element_type=jnp.float32)               # (tq, dvp)

    # Output projection + residual (residual stays f32).
    out = jnp.dot(ctx.astype(jnp.bfloat16), wo_ref[...],
                  preferred_element_type=jnp.float32) + x_q         # (tq, dmp)

    # InstanceNorm1d over the true d_model features.  Padded feature columns of
    # `out` are exactly zero (zero-padded weights + zero-padded residual), so the
    # sum only needs the 1/d_model factor; mask pads before the variance.
    mean = jnp.sum(out, axis=-1, keepdims=True) * (1.0 / d_model)
    centered = out - mean
    if d_model != out.shape[-1]:
        col = jax.lax.broadcasted_iota(jnp.int32, out.shape, 1)
        centered = jnp.where(col < d_model, centered, 0.0)
    var = jnp.sum(centered * centered, axis=-1, keepdims=True) * (1.0 / d_model)
    o_ref[0] = (centered * jax.lax.rsqrt(var + EPS)).astype(o_ref.dtype)


def self_attention_layer(x, wq_t, wk_t, wv_t, wo_t, d_k, *, tq=128):
    """x: (B, S, d_model) f32; w*_t: (in_features, out_features) pre-transposed."""
    B, S, d_model = x.shape
    d_v = wv_t.shape[1]
    assert wq_t.shape == (d_model, d_k) and wk_t.shape == (d_model, d_k)
    assert wv_t.shape == (d_model, d_v) and wo_t.shape == (d_v, d_model)

    dmp = _round_up(d_model, LANE)
    dkp = _round_up(d_k, LANE)
    dvp = _round_up(d_v, LANE)

    # Query-tile size: fall back to whole-sequence tiles for small / ragged S.
    if S % tq != 0:
        tq = S
    n_qt = S // tq

    # Zero-pad so every matmul operand and the output block are lane-dense
    # (last dim a multiple of 128); zero padding keeps the math exact.
    x_p = _pad_axis(x, 2, dmp)                                      # (B, S, dmp) f32

    scale = 1.0 / math.sqrt(d_k)                                    # fold into Wq
    wq_p = _pad_axis(_pad_axis(wq_t * scale, 0, dmp), 1, dkp).astype(jnp.bfloat16)
    wk_p = _pad_axis(_pad_axis(wk_t, 0, dmp), 1, dkp)
    wv_p = _pad_axis(_pad_axis(wv_t, 0, dmp), 1, dvp)
    wkv_p = jnp.concatenate([wk_p, wv_p], axis=1).astype(jnp.bfloat16)  # (dmp, dkp+dvp)
    wo_p = _pad_axis(_pad_axis(wo_t, 0, dvp), 1, dmp).astype(jnp.bfloat16)

    kernel = functools.partial(_self_attn_kernel,
                               d_model=d_model, dkp=dkp, tq=tq, n_qt=n_qt)

    y_p = pl.pallas_call(
        kernel,
        out_shape=jax.ShapeDtypeStruct((B, S, dmp), x.dtype),
        grid_spec=pltpu.PrefetchScalarGridSpec(
            num_scalar_prefetch=0,
            grid=(B, n_qt),
            in_specs=[
                # Full-sequence activations for this batch element; block index is
                # constant across qi so the DMA only happens when b changes.
                pl.BlockSpec((1, S, dmp), lambda b, qi: (b, 0, 0)),
                pl.BlockSpec((dmp, dkp), lambda b, qi: (0, 0)),          # Wq^T * 1/sqrt(d_k)
                pl.BlockSpec((dmp, dkp + dvp), lambda b, qi: (0, 0)),    # [Wk^T | Wv^T] fused
                pl.BlockSpec((dvp, dmp), lambda b, qi: (0, 0)),          # Wo^T
            ],
            out_specs=pl.BlockSpec((1, tq, dmp), lambda b, qi: (b, qi, 0)),
            scratch_shapes=[pltpu.VMEM((S, dkp + dvp), jnp.bfloat16)],   # resident K|V
        ),
        compiler_params=pltpu.CompilerParams(
            # K/V scratch is carried across the query-tile axis -> "arbitrary";
            # batch axis is independent -> "parallel" (megacore sharding).
            dimension_semantics=("parallel", "arbitrary"),
        ),
    )(x_p, wq_p, wkv_p, wo_p)

    return y_p[..., :d_model]


def _reference(x, wq_t, wk_t, wv_t, wo_t, d_k):
    # Pure-JAX f32 reference mirroring the PyTorch forward.
    q = x @ wq_t
    k = x @ wk_t
    v = x @ wv_t
    score = jnp.einsum("bqd,bkd->bqk", q, k) / math.sqrt(d_k)
    attn = jax.nn.softmax(score, axis=-1)
    context = jnp.einsum("bqk,bkd->bqd", attn, v)
    out = context @ wo_t + x
    mean = jnp.mean(out, axis=-1, keepdims=True)
    var = jnp.mean((out - mean) ** 2, axis=-1, keepdims=True)
    return (out - mean) / jnp.sqrt(var + EPS)


if __name__ == "__main__":
    # Small shapes consistent with the module.
    B, S = 2, 8
    d_model, d_k, d_v = 32, 16, 16

    key = jax.random.PRNGKey(0)
    kx, kq, kk, kv, ko = jax.random.split(key, 5)

    x = jax.random.normal(kx, (B, S, d_model), dtype=jnp.float32)

    # Deterministic Linear-style init; stored pre-transposed (in, out).
    def init_w(k, fan_in, fan_out):
        bound = 1.0 / math.sqrt(fan_in)
        return jax.random.uniform(k, (fan_in, fan_out), jnp.float32, -bound, bound)

    wq_t = init_w(kq, d_model, d_k)
    wk_t = init_w(kk, d_model, d_k)
    wv_t = init_w(kv, d_model, d_v)
    wo_t = init_w(ko, d_v, d_model)

    y = self_attention_layer(x, wq_t, wk_t, wv_t, wo_t, d_k)
    y = jax.block_until_ready(y)

    y_ref = _reference(x, wq_t, wk_t, wv_t, wo_t, d_k)
    assert y.shape == (B, S, d_model)
    # Tolerance accounts for bf16 MXU inputs (f32 accumulation) + approx reciprocal.
    err = float(jnp.max(jnp.abs(y - y_ref)))
    assert jnp.allclose(y, y_ref, atol=2e-2, rtol=2e-2), f"mismatch vs reference, max|diff|={err}"

    print("KERNEL_OK")
</pallas_src>

<mosaic_0001>
module attributes {stable_mosaic.version = 11 : i64} {
  func.func @_self_attn_kernel(%arg0: i32, %arg1: i32, %arg2: memref<1x8x128xf32, #tpu.memory_space<vmem>>, %arg3: memref<128x128xbf16, #tpu.memory_space<vmem>>, %arg4: memref<128x256xbf16, #tpu.memory_space<vmem>>, %arg5: memref<128x128xbf16, #tpu.memory_space<vmem>>, %arg6: memref<1x8x128xf32, #tpu.memory_space<vmem>>, %arg7: memref<8x256xbf16, #tpu.memory_space<vmem>>) attributes {dimension_semantics = [#tpu.dimension_semantics<parallel>, #tpu.dimension_semantics<arbitrary>], iteration_bounds = array<i64: 2, 1>, scalar_prefetch = 0 : i64, scratch_operands = 1 : i64, tpu.core_type = #tpu.core_type<tc>, window_params = [{transform_indices = @transform_0, window_bounds = array<i64: 1, 8, 128>}, {pipeline_mode = #tpu.pipeline_mode<synchronous>, transform_indices = @transform_1, window_bounds = array<i64: 128, 128>}, {pipeline_mode = #tpu.pipeline_mode<synchronous>, transform_indices = @transform_2, window_bounds = array<i64: 128, 256>}, {pipeline_mode = #tpu.pipeline_mode<synchronous>, transform_indices = @transform_3, window_bounds = array<i64: 128, 128>}, {transform_indices = @transform_4, window_bounds = array<i64: 1, 8, 128>}]} {
    %c0_i32 = arith.constant 0 : i32
    %0 = arith.cmpi eq, %arg1, %c0_i32 : i32
    %1 = arith.extui %0 : i1 to i32
    %c0_i32_0 = arith.constant 0 : i32
    %2 = arith.cmpi ne, %1, %c0_i32_0 : i32
    scf.if %2 {
      %c0_24 = arith.constant 0 : index
      %c0_25 = arith.constant 0 : index
      %c0_26 = arith.constant 0 : index
      %52 = vector.load %arg2[%c0_24, %c0_25, %c0_26] : memref<1x8x128xf32, #tpu.memory_space<vmem>>, vector<1x8x128xf32>
      %53 = vector.shape_cast %52 : vector<1x8x128xf32> to vector<8x128xf32>
      %54 = arith.truncf %53 : vector<8x128xf32> to vector<8x128xbf16>
      %c0_27 = arith.constant 0 : index
      %c0_28 = arith.constant 0 : index
      %55 = vector.load %arg4[%c0_27, %c0_28] : memref<128x256xbf16, #tpu.memory_space<vmem>>, vector<128x256xbf16>
      %cst_29 = arith.constant dense<0.000000e+00> : vector<8x256xf32>
      %56 = tpu.matmul %54, %55, %cst_29 {dimension_numbers = #tpu.dot_dimension_numbers<[1], [0], [0], [1], [0, 0, 1, 1], [], []>} : vector<8x128xbf16>, vector<128x256xbf16>, vector<8x256xf32> -> vector<8x256xf32>
      %57 = arith.truncf %56 : vector<8x256xf32> to vector<8x256xbf16>
      %c0_30 = arith.constant 0 : index
      %c0_31 = arith.constant 0 : index
      %58 = vector.load %arg7[%c0_30, %c0_31] : memref<8x256xbf16, #tpu.memory_space<vmem>>, vector<8x256xbf16>
      tpu.vector_store %arg7[%c0_30, %c0_31], %57 {strides = array<i32>} : memref<8x256xbf16, #tpu.memory_space<vmem>>, vector<8x256xbf16>,
    } else {
    }
    %c0 = arith.constant 0 : index
    %c0_1 = arith.constant 0 : index
    %c0_2 = arith.constant 0 : index
    %3 = vector.load %arg2[%c0, %c0_1, %c0_2] : memref<1x8x128xf32, #tpu.memory_space<vmem>>, vector<1x8x128xf32>
    %4 = vector.shape_cast %3 : vector<1x8x128xf32> to vector<8x128xf32>
    %5 = arith.truncf %4 : vector<8x128xf32> to vector<8x128xbf16>
    %c0_3 = arith.constant 0 : index
    %c0_4 = arith.constant 0 : index
    %6 = vector.load %arg3[%c0_3, %c0_4] : memref<128x128xbf16, #tpu.memory_space<vmem>>, vector<128x128xbf16>
    %cst = arith.constant dense<0.000000e+00> : vector<8x128xf32>
    %7 = tpu.matmul %5, %6, %cst {dimension_numbers = #tpu.dot_dimension_numbers<[1], [0], [0], [1], [0, 0, 1, 1], [], []>} : vector<8x128xbf16>, vector<128x128xbf16>, vector<8x128xf32> -> vector<8x128xf32>
    %c0_5 = arith.constant 0 : index
    %c0_6 = arith.constant 0 : index
    %8 = vector.load %arg7[%c0_5, %c0_6] : memref<8x256xbf16, #tpu.memory_space<vmem>>, vector<8x128xbf16>
    %c0_7 = arith.constant 0 : index
    %c128 = arith.constant 128 : index
    %9 = vector.load %arg7[%c0_7, %c128] : memref<8x256xbf16, #tpu.memory_space<vmem>>, vector<8x128xbf16>
    %10 = arith.truncf %7 : vector<8x128xf32> to vector<8x128xbf16>
    %cst_8 = arith.constant dense<0.000000e+00> : vector<8x8xf32>
    %11 = tpu.matmul %10, %8, %cst_8 {dimension_numbers = #tpu.dot_dimension_numbers<[1], [1], [0], [0], [0, 0, 1, 0], [], []>} : vector<8x128xbf16>, vector<8x128xbf16>, vector<8x8xf32> -> vector<8x8xf32>
    %cst_9 = arith.constant dense<0xFF800000> : vector<8xf32>
    %12 = vector.multi_reduction <maximumf>, %11, %cst_9 [1] : vector<8x8xf32> to vector<8xf32>
    %13 = vector.shape_cast %12 : vector<8xf32> to vector<8x1xf32>
    %14 = vector.broadcast %13 : vector<8x1xf32> to vector<8x8xf32>
    %15 = arith.subf %11, %14 : vector<8x8xf32>
    %16 = math.exp %15 : vector<8x8xf32>
    %cst_10 = arith.constant dense<0.000000e+00> : vector<8xf32>
    %17 = vector.multi_reduction <add>, %16, %cst_10 [1] : vector<8x8xf32> to vector<8xf32>
    %18 = vector.shape_cast %17 : vector<8xf32> to vector<8x1xf32>
    %19 = tpu.reciprocal %18 {approx = true} : vector<8x1xf32> -> vector<8x1xf32>
    %20 = vector.broadcast %19 : vector<8x1xf32> to vector<8x8xf32>
    %21 = arith.mulf %16, %20 : vector<8x8xf32>
    %22 = arith.truncf %21 : vector<8x8xf32> to vector<8x8xbf16>
    %cst_11 = arith.constant dense<0.000000e+00> : vector<8x128xf32>
    %23 = tpu.matmul %22, %9, %cst_11 {dimension_numbers = #tpu.dot_dimension_numbers<[1], [0], [0], [1], [0, 0, 1, 1], [], []>} : vector<8x8xbf16>, vector<8x128xbf16>, vector<8x128xf32> -> vector<8x128xf32>
    %24 = arith.truncf %23 : vector<8x128xf32> to vector<8x128xbf16>
    %c0_12 = arith.constant 0 : index
    %c0_13 = arith.constant 0 : index
    %25 = vector.load %arg5[%c0_12, %c0_13] : memref<128x128xbf16, #tpu.memory_space<vmem>>, vector<128x128xbf16>
    %cst_14 = arith.constant dense<0.000000e+00> : vector<8x128xf32>
    %26 = tpu.matmul %24, %25, %cst_14 {dimension_numbers = #tpu.dot_dimension_numbers<[1], [0], [0], [1], [0, 0, 1, 1], [], []>} : vector<8x128xbf16>, vector<128x128xbf16>, vector<8x128xf32> -> vector<8x128xf32>
    %27 = arith.addf %26, %4 : vector<8x128xf32>
    %cst_15 = arith.constant dense<0.000000e+00> : vector<8xf32>
    %28 = vector.multi_reduction <add>, %27, %cst_15 [1] : vector<8x128xf32> to vector<8xf32>
    %29 = vector.shape_cast %28 : vector<8xf32> to vector<8x1xf32>
    %cst_16 = arith.constant 3.125000e-02 : f32
    %30 = vector.broadcast %cst_16 : f32 to vector<8x1xf32>
    %31 = arith.mulf %29, %30 : vector<8x1xf32>
    %32 = vector.broadcast %31 : vector<8x1xf32> to vector<8x128xf32>
    %33 = arith.subf %27, %32 : vector<8x128xf32>
    %34 = tpu.iota {dimensions = array<i32: 1>} : vector<8x128xi32>
    %c32_i32 = arith.constant 32 : i32
    %35 = vector.broadcast %c32_i32 : i32 to vector<8x128xi32>
    %36 = arith.cmpi slt, %34, %35 : vector<8x128xi32>
    %cst_17 = arith.constant 0.000000e+00 : f32
    %37 = vector.broadcast %cst_17 : f32 to vector<8x128xf32>
    %38 = arith.select %36, %33, %37 : vector<8x128xi1>, vector<8x128xf32>
    %39 = arith.mulf %38, %38 : vector<8x128xf32>
    %cst_18 = arith.constant dense<0.000000e+00> : vector<8xf32>
    %40 = vector.multi_reduction <add>, %39, %cst_18 [1] : vector<8x128xf32> to vector<8xf32>
    %41 = vector.shape_cast %40 : vector<8xf32> to vector<8x1xf32>
    %cst_19 = arith.constant 3.125000e-02 : f32
    %42 = vector.broadcast %cst_19 : f32 to vector<8x1xf32>
    %43 = arith.mulf %41, %42 : vector<8x1xf32>
    %cst_20 = arith.constant 9.99999974E-6 : f32
    %44 = vector.broadcast %cst_20 : f32 to vector<8x1xf32>
    %45 = arith.addf %43, %44 : vector<8x1xf32>
    %46 = math.rsqrt %45 : vector<8x1xf32>
    %47 = vector.broadcast %46 : vector<8x1xf32> to vector<8x128xf32>
    %48 = arith.mulf %38, %47 : vector<8x128xf32>
    %c0_21 = arith.constant 0 : index
    %c0_22 = arith.constant 0 : index
    %c0_23 = arith.constant 0 : index
    %49 = vector.load %arg6[%c0_21, %c0_22, %c0_23] : memref<1x8x128xf32, #tpu.memory_space<vmem>>, vector<1x8x128xf32>
    %50 = vector.shape_cast %49 : vector<1x8x128xf32> to vector<8x128xf32>
    %51 = vector.shape_cast %48 : vector<8x128xf32> to vector<1x8x128xf32>
    tpu.vector_store %arg6[%c0_21, %c0_22, %c0_23], %51 {strides = array<i32>} : memref<1x8x128xf32, #tpu.memory_space<vmem>>, vector<1x8x128xf32>,
    return
  }
  func.func @transform_0(%arg0: i32, %arg1: i32) -> (i32, i32, i32) {
    %c0_i32 = arith.constant 0 : i32
    %c0_i32_0 = arith.constant 0 : i32
    %c0_i32_1 = arith.constant 0 : i32
    return %arg0, %c0_i32, %c0_i32_0 : i32, i32, i32
  }
  func.func @transform_1(%arg0: i32, %arg1: i32) -> (i32, i32) {
    %c0_i32 = arith.constant 0 : i32
    %c0_i32_0 = arith.constant 0 : i32
    %c0_i32_1 = arith.constant 0 : i32
    return %c0_i32, %c0_i32_0 : i32, i32
  }
  func.func @transform_2(%arg0: i32, %arg1: i32) -> (i32, i32) {
    %c0_i32 = arith.constant 0 : i32
    %c0_i32_0 = arith.constant 0 : i32
    %c0_i32_1 = arith.constant 0 : i32
    return %c0_i32, %c0_i32_0 : i32, i32
  }
  func.func @transform_3(%arg0: i32, %arg1: i32) -> (i32, i32) {
    %c0_i32 = arith.constant 0 : i32
    %c0_i32_0 = arith.constant 0 : i32
    %c0_i32_1 = arith.constant 0 : i32
    return %c0_i32, %c0_i32_0 : i32, i32
  }
  func.func @transform_4(%arg0: i32, %arg1: i32) -> (i32, i32, i32) {
    %c0_i32 = arith.constant 0 : i32
    %c0_i32_0 = arith.constant 0 : i32
    return %arg0, %arg1, %c0_i32 : i32, i32, i32
  }
}

</mosaic_0001>

<llo_original>
// kernel: tpu_custom_call.1
$region0: #{tpu_custom_call.1}
  #allocation0 [shape = 'u32[]', space=smem, size = 0x4, offset = 0x4, fixed_abs, tag = 'smem constant byte address 0x4 - core index']
  #allocation1 [shape = 'u32[144,128]{1,0:T(1,128)}', space=vmem, size = 0x12000, scoped, tag = 'internal scratch']
  #allocation2 [shape = 'bf16[8,256]{1,0:T(8,128)(2,1)}', space=vmem, size = 0x1000, scoped, tag = 'scratch operand']
  %s0 = inlined_call_operand.hbm [shape: f32[2,8,128], index: 0, kind: input, shape index: {}]
  %s1 = inlined_call_operand.hbm [shape: bf16[128,128], index: 1, kind: input, shape index: {}]
  %s2 = inlined_call_operand.hbm [shape: bf16[128,256], index: 2, kind: input, shape index: {}]
  %s3 = inlined_call_operand.hbm [shape: bf16[128,128], index: 3, kind: input, shape index: {}]
  %s4 = inlined_call_operand.hbm [shape: f32[2,8,128], index: 4, kind: output, shape index: {}]
  %s5 = sld [smem:[#allocation0]]
  $region69: #{tpu_custom_call.1} parent=0
    _
  %s7 = ssub.s32 1, %s5
  %s8 = scalar_select 0, %s7, %s5
  $region1: #{tpu_custom_call.1} parent=0
    #allocation3 [shape = 'u8[8192]{0}', space=vmem, size = 0x2000, scoped, tag = 'input window, operand 0']
    #allocation4 [shape = 's32[2]{0}', space=sflag, size = 0x8, scoped, tag = 'scoped memory for tpu_custom_call.1']
    #allocation5 [shape = 's32[2]{0}', space=sflag, size = 0x8, scoped, tag = 'scoped memory for tpu_custom_call.1']
    #allocation6 [shape = 'u8[32768]{0}', space=vmem, size = 0x8000, scoped, tag = 'input window, operand 1, single buffered']
    #allocation7 [shape = 's32[1]{0}', space=sflag, size = 0x4, scoped, tag = 'scoped memory for tpu_custom_call.1']
    #allocation8 [shape = 'u8[65536]{0}', space=vmem, size = 0x10000, scoped, tag = 'input window, operand 2, single buffered']
    #allocation9 [shape = 'u8[32768]{0}', space=vmem, size = 0x8000, scoped, tag = 'input window, operand 3, single buffered']
    #allocation10 [shape = 's32[1]{0}', space=sflag, size = 0x4, scoped, tag = 'scoped memory for tpu_custom_call.1']
    #allocation11 [shape = 'u8[8192]{0}', space=vmem, size = 0x2000, scoped, tag = 'output window, operand 0']
    %9 = vsyncpa [#allocation4], 0
    %s10 = scalar_lea.sflag [#allocation4], 1
    %11 = vsyncpa %s10, 0
    %12 = vsyncpa [#allocation7], 0
    %13 = vsyncpa [#allocation10], 0
    %14 = vsyncpa [#allocation5], 0
    %s15 = scalar_lea.sflag [#allocation5], 1
    %16 = vsyncpa %s15, 0
    loop: start=0, step=1, limit=4
    $region2: #{tpu_custom_call.1} parent=1 // loop_pre_header
      _
    $region3: #{tpu_custom_call.1} parent=1 // loop_header
      %s18 = sphi 0, %s22
      %p19 = scmp.ge.s32.totalorder %s18, 4
      %s25 = sphi 0, %s37
      %s26 = sphi 0, %s33
      %s27 = sphi 0, %s25
      %s28 = sphi 0, %s26
      %s29 = sphi 0, %s27
      %s30 = sphi 0, %s28
      %s40 = sphi 0, %s42
      %s43 = sphi 0, %s40
      %s44 = sphi 0, %s43
      %s60 = sphi 0, %s44
      %s64 = sphi 0, %s64
      %s66 = sphi 0, %s64
      %s67 = sphi 0, %s66
      %s81 = sphi 0, %s67
      %s85 = sphi 0, %s85
      %s87 = sphi 0, %s85
      %s88 = sphi 0, %s87
      %s102 = sphi 0, %s88
      %s106 = sphi 0, %s106
      %s108 = sphi 0, %s106
      %s109 = sphi 0, %s108
      %s123 = sphi 0, %s109
      %s131 = sphi 0, %s133
      %s134 = sphi 0, %s131
      %s135 = sphi 0, %s134
      %s151 = sphi 0, %s135
    $region4: #{tpu_custom_call.1} parent=1 // loop_header_branch
      %21 = sbr.rel (%p19) target = $region8
    $region5: #{tpu_custom_call.1} parent=1 // loop_body
      %s23 = ssub.s32 %s18, 1
      %s24 = ssub.s32 %s18, 2
      %s31 = sadd.s32 1, %s26
      %p32 = scmp.ge.s32.totalorder %s31, 1
      %s33 = scalar_select %p32, 0, %s31
      %s34 = sadd.s32 1, %s25
      %s35 = scalar_select %p32, %s34, %s25
      %p36 = scmp.ge.s32.totalorder %s35, 2
      %s37 = scalar_select %p36, 0, %s35
      %s38 = ssub.s32 %s25, %s37
      %p39 = scmp.eq.s32.totalorder %s38, 0
      %s41 = sadd.s32 %s40, 1
      %s42 = scalar_select %p39, %s40, %s41
      %p45 = pneg %p39
      %p46 = scmp.eq.s32.totalorder %s18, 1
      %p47 = por %p45, %p46
      %p48 = scmp.ne.s32.totalorder %s40, %s43
      %p49 = scmp.eq.s32.totalorder %s18, 0
      %p50 = por %p48, %p49
      %p51 = scmp.ne.s32.totalorder %s40, %s43
      %p52 = scmp.eq.s32.totalorder %s23, 1
      %p53 = por %p51, %p52
      %p54 = scmp.ne.s32.totalorder %s43, %s44
      %p55 = scmp.eq.s32.totalorder %s23, 0
      %p56 = por %p54, %p55
      %p57 = scmp.ne.s32.totalorder %s43, %s44
      %p58 = scmp.eq.s32.totalorder %s24, 1
      %p59 = por %p57, %p58
      %p61 = scmp.ne.s32.totalorder %s44, %s60
      %p62 = scmp.eq.s32.totalorder %s24, 0
      %p63 = por %p61, %p62
      %s65 = sadd.s32 %s64, 1
      %p68 = scmp.eq.s32.totalorder %s18, 1
      %p69 = scmp.ne.s32.totalorder %s64, %s66
      %p70 = scmp.eq.s32.totalorder %s18, 0
      %p71 = por %p69, %p70
      %p72 = scmp.ne.s32.totalorder %s64, %s66
      %p73 = scmp.eq.s32.totalorder %s23, 1
      %p74 = por %p72, %p73
      %p75 = scmp.ne.s32.totalorder %s66, %s67
      %p76 = scmp.eq.s32.totalorder %s23, 0
      %p77 = por %p75, %p76
      %p78 = scmp.ne.s32.totalorder %s66, %s67
      %p79 = scmp.eq.s32.totalorder %s24, 1
      %p80 = por %p78, %p79
      %p82 = scmp.ne.s32.totalorder %s67, %s81
      %p83 = scmp.eq.s32.totalorder %s24, 0
      %p84 = por %p82, %p83
      %s86 = sadd.s32 %s85, 1
      %p89 = scmp.eq.s32.totalorder %s18, 1
      %p90 = scmp.ne.s32.totalorder %s85, %s87
      %p91 = scmp.eq.s32.totalorder %s18, 0
      %p92 = por %p90, %p91
      %p93 = scmp.ne.s32.totalorder %s85, %s87
      %p94 = scmp.eq.s32.totalorder %s23, 1
      %p95 = por %p93, %p94
      %p96 = scmp.ne.s32.totalorder %s87, %s88
      %p97 = scmp.eq.s32.totalorder %s23, 0
      %p98 = por %p96, %p97
      %p99 = scmp.ne.s32.totalorder %s87, %s88
      %p100 = scmp.eq.s32.totalorder %s24, 1
      %p101 = por %p99, %p100
      %p103 = scmp.ne.s32.totalorder %s88, %s102
      %p104 = scmp.eq.s32.totalorder %s24, 0
      %p105 = por %p103, %p104
      %s107 = sadd.s32 %s106, 1
      %p110 = scmp.eq.s32.totalorder %s18, 1
      %p111 = scmp.ne.s32.totalorder %s106, %s108
      %p112 = scmp.eq.s32.totalorder %s18, 0
      %p113 = por %p111, %p112
      %p114 = scmp.ne.s32.totalorder %s106, %s108
      %p115 = scmp.eq.s32.totalorder %s23, 1
      %p116 = por %p114, %p115
      %p117 = scmp.ne.s32.totalorder %s108, %s109
      %p118 = scmp.eq.s32.totalorder %s23, 0
      %p119 = por %p117, %p118
      %p120 = scmp.ne.s32.totalorder %s108, %s109
      %p121 = scmp.eq.s32.totalorder %s24, 1
      %p122 = por %p120, %p121
      %p124 = scmp.ne.s32.totalorder %s109, %s123
      %p125 = scmp.eq.s32.totalorder %s24, 0
      %p126 = por %p124, %p125
      %s127 = ssub.s32 %s25, %s37
      %s128 = ssub.s32 %s26, %s33
      %s129 = sor.u32 %s127, %s128
      %p130 = scmp.eq.s32.totalorder %s129, 0
      %s132 = sadd.s32 %s131, 1
      %s133 = scalar_select %p130, %s131, %s132
      %p136 = pneg %p130
      %p137 = scmp.eq.s32.totalorder %s18, 1
      %p138 = por %p136, %p137
      %p139 = scmp.ne.s32.totalorder %s131, %s134
      %p140 = scmp.eq.s32.totalorder %s18, 0
      %p141 = por %p139, %p140
      %p142 = scmp.ne.s32.totalorder %s131, %s134
      %p143 = scmp.eq.s32.totalorder %s23, 1
      %p144 = por %p142, %p143
      %p145 = scmp.ne.s32.totalorder %s134, %s135
      %p146 = scmp.eq.s32.totalorder %s23, 0
      %p147 = por %p145, %p146
      %p148 = scmp.ne.s32.totalorder %s134, %s135
      %p149 = scmp.eq.s32.totalorder %s24, 1
      %p150 = por %p148, %p149
      %p152 = scmp.ne.s32.totalorder %s135, %s151
      %p153 = scmp.eq.s32.totalorder %s24, 0
      %p154 = por %p152, %p153
      %p155 = scmp.le.s32.totalorder 1, %s18
      %p156 = scmp.lt.s32.totalorder %s18, 3
      %p157 = pnand %p155, %p156
      %p158 = pneg %p157
      // Predicated region
      $region9: #{tpu_custom_call.1} parent=5 // pred_check
        _
      $region10: #{tpu_custom_call.1} parent=5 // pred_check_branch
        %160 = sbr.rel (%p157) target = $region12
      $region11: #{tpu_custom_call.1} parent=5 // pred_region
        %s161 = ssub.s32 %s18, 1
        // Predicated region
        $region13: #{tpu_custom_call.1} parent=11 // pred_check
          %p162 = pneg %p77
        $region14: #{tpu_custom_call.1} parent=11 // pred_check_branch
          %164 = sbr.rel (%p162) target = $region16
        $region15: #{tpu_custom_call.1} parent=11 // pred_region
          %s166 = ssub.s32 1024, 1024
          %167 = vsyncadd [#allocation7], %s166
          %s168 = sshll.u32 [#allocation6], 4
          %s169 = int_to_ptr.vmem [resolvable:$true] %s168
          %174 = dma.hbm_to_vmem [thread:$0]  %s1, 1024, %s169, [#allocation7], 64, 64, 4
        $region16: #{tpu_custom_call.1} parent=11 // pred_fallthru
          _
        // Predicated region
        $region17: #{tpu_custom_call.1} parent=11 // pred_check
          %p175 = pneg %p98
        $region18: #{tpu_custom_call.1} parent=11 // pred_check_branch
          %177 = sbr.rel (%p175) target = $region20
        $region19: #{tpu_custom_call.1} parent=11 // pred_region
          %s179 = ssub.s32 2048, 2048
          %180 = vsyncadd [#allocation7], %s179
          %s181 = sshll.u32 [#allocation8], 4
          %s182 = int_to_ptr.vmem [resolvable:$true] %s181
          %187 = dma.hbm_to_vmem [thread:$0]  %s2, 2048, %s182, [#allocation7], 128, 128, 8
        $region20: #{tpu_custom_call.1} parent=11 // pred_fallthru
          _
        // Predicated region
        $region21: #{tpu_custom_call.1} parent=11 // pred_check
          %p188 = pneg %p119
        $region22: #{tpu_custom_call.1} parent=11 // pred_check_branch
          %190 = sbr.rel (%p188) target = $region24
        $region23: #{tpu_custom_call.1} parent=11 // pred_region
          %s192 = ssub.s32 1024, 1024
          %193 = vsyncadd [#allocation10], %s192
          %s194 = sshll.u32 [#allocation9], 4
          %s195 = int_to_ptr.vmem [resolvable:$true] %s194
          %200 = dma.hbm_to_vmem [thread:$0]  %s3, 1024, %s195, [#allocation10], 64, 64, 4
        $region24: #{tpu_custom_call.1} parent=11 // pred_fallthru
          _
      $region12: #{tpu_custom_call.1} parent=5 // pred_fallthru
        _
      %p201 = scmp.lt.s32.totalorder %s18, 2
      // Predicated region
      $region25: #{tpu_custom_call.1} parent=5 // pred_check
        %p202 = pneg %p201
      $region26: #{tpu_custom_call.1} parent=5 // pred_check_branch
        %204 = sbr.rel (%p202) target = $region28
      $region27: #{tpu_custom_call.1} parent=5 // pred_region
        // Predicated region
        $region29: #{tpu_custom_call.1} parent=27 // pred_check
          %p205 = pneg %p50
        $region30: #{tpu_custom_call.1} parent=27 // pred_check_branch
          %207 = sbr.rel (%p205) target = $region32
        $region31: #{tpu_custom_call.1} parent=27 // pred_region
          %s208 = sand.u32 %s40, 1
          %s209 = scalar_lea.sflag [#allocation4], %s208
          %s210 = sand.u32 %s40, 1
          %s211 = smul.addr %s210, 8
          %s212 = scalar_lea.vmem [#allocation3], %s211
          %s214 = ssub.s32 128, 128
          %215 = vsyncadd %s209, %s214
          %s216 = smul.addr %s25, 128
          %s217 = scalar_lea.hbm %s0, %s216
          %s219 = sshll.u32 %s212, 4
          %s220 = int_to_ptr.vmem [resolvable:$true] %s219
          %222 = dma.hbm_to_vmem [thread:$0]  %s217, 128, %s220, %s209
        $region32: #{tpu_custom_call.1} parent=27 // pred_fallthru
          _
      $region28: #{tpu_custom_call.1} parent=5 // pred_fallthru
        _
      %p223 = scmp.le.s32.totalorder 1, %s18
      %p224 = scmp.lt.s32.totalorder %s18, 3
      %p225 = pnand %p223, %p224
      %p226 = pneg %p225
      // Predicated region
      $region33: #{tpu_custom_call.1} parent=5 // pred_check
        _
      $region34: #{tpu_custom_call.1} parent=5 // pred_check_branch
        %228 = sbr.rel (%p225) target = $region36
      $region35: #{tpu_custom_call.1} parent=5 // pred_region
        %s229 = ssub.s32 %s18, 1
        %s230 = sand.u32 %s43, 1
        %s231 = scalar_lea.sflag [#allocation4], %s230
        %s232 = sand.u32 %s43, 1
        %s233 = smul.addr %s232, 8
        %s234 = scalar_lea.vmem [#allocation3], %s233
        // Predicated region
        $region37: #{tpu_custom_call.1} parent=35 // pred_check
          %p235 = pneg %p56
        $region38: #{tpu_custom_call.1} parent=35 // pred_check_branch
          %237 = sbr.rel (%p235) target = $region40
        $region39: #{tpu_custom_call.1} parent=35 // pred_region
          %238 = dma.done %s231, 128
        $region40: #{tpu_custom_call.1} parent=35 // pred_fallthru
          _
        // Predicated region
        $region41: #{tpu_custom_call.1} parent=35 // pred_check
          %p239 = pneg %p77
        $region42: #{tpu_custom_call.1} parent=35 // pred_check_branch
          %241 = sbr.rel (%p239) target = $region44
        $region43: #{tpu_custom_call.1} parent=35 // pred_region
          %242 = dma.done [#allocation7], 1024
        $region44: #{tpu_custom_call.1} parent=35 // pred_fallthru
          _
        // Predicated region
        $region45: #{tpu_custom_call.1} parent=35 // pred_check
          %p243 = pneg %p98
        $region46: #{tpu_custom_call.1} parent=35 // pred_check_branch
          %245 = sbr.rel (%p243) target = $region48
        $region47: #{tpu_custom_call.1} parent=35 // pred_region
          %246 = dma.done [#allocation7], 2048
        $region48: #{tpu_custom_call.1} parent=35 // pred_fallthru
          _
        // Predicated region
        $region49: #{tpu_custom_call.1} parent=35 // pred_check
          %p247 = pneg %p119
        $region50: #{tpu_custom_call.1} parent=35 // pred_check_branch
          %249 = sbr.rel (%p247) target = $region52
        $region51: #{tpu_custom_call.1} parent=35 // pred_region
          %250 = dma.done [#allocation10], 1024
        $region52: #{tpu_custom_call.1} parent=35 // pred_fallthru
          _
        %s251 = sand.u32 %s43, 1
        %s252 = scalar_lea.sflag [#allocation4], %s251
        %s253 = sand.u32 %s43, 1
        %s254 = smul.addr %s253, 8
        %s255 = scalar_lea.vmem [#allocation3], %s254
        %p256 = pneg %p56
        %p257 = pneg %p53
        %p258 = pneg %p77
        %p259 = pneg %p74
        %p260 = pneg %p98
        %p261 = pneg %p95
        %p262 = pneg %p119
        %p263 = pneg %p116
        %p264 = pneg %p147
        %p265 = pneg %p144
        %s266 = sand.u32 %s134, 1
        %s267 = scalar_lea.sflag [#allocation5], %s266
        %s268 = sand.u32 %s134, 1
        %s269 = smul.addr %s268, 8
        %s270 = scalar_lea.vmem [#allocation11], %s269
        %p272 = scmp.eq.s32.totalorder %s28, 0
        // Predicated region
        $region53: #{tpu_custom_call.1} parent=35 // pred_check
          %p273 = pneg %p272
        $region54: #{tpu_custom_call.1} parent=35 // pred_check_branch
          %275 = sbr.rel (%p273) target = $region56
        $region55: #{tpu_custom_call.1} parent=35 // pred_region
          %v276 = vld [vmem:[%s234] sm:$0xff]
          %v277 = vpack.c.bf16 %v276, %v276
          %v278 = vld [vmem:[#allocation8] sm:$0xff]
          %v279 = vld [vmem:[#allocation8 + $0x8] sm:$0xff]
          %v280 = vld [vmem:[#allocation8 + $0x10] sm:$0xff]
          %v281 = vld [vmem:[#allocation8 + $0x18] sm:$0xff]
          %v282 = vld [vmem:[#allocation8 + $0x20] sm:$0xff]
          %v283 = vld [vmem:[#allocation8 + $0x28] sm:$0xff]
          %v284 = vld [vmem:[#allocation8 + $0x30] sm:$0xff]
          %v285 = vld [vmem:[#allocation8 + $0x38] sm:$0xff]
          %v286 = vld [vmem:[#allocation8 + $0x40] sm:$0xff]
          %v287 = vld [vmem:[#allocation8 + $0x48] sm:$0xff]
          %v288 = vld [vmem:[#allocation8 + $0x50] sm:$0xff]
          %v289 = vld [vmem:[#allocation8 + $0x58] sm:$0xff]
          %v290 = vld [vmem:[#allocation8 + $0x60] sm:$0xff]
          %v291 = vld [vmem:[#allocation8 + $0x68] sm:$0xff]
          %v292 = vld [vmem:[#allocation8 + $0x70] sm:$0xff]
          %v293 = vld [vmem:[#allocation8 + $0x78] sm:$0xff]
          %v310 = vunpack.c.l.b16 %v278
          %v311 = vunpack.c.h.b16 %v278
          %v312 = vunpack.c.l.b16 %v279
          %v313 = vunpack.c.h.b16 %v279
          %v314 = vunpack.c.l.b16 %v280
          %v315 = vunpack.c.h.b16 %v280
          %v316 = vunpack.c.l.b16 %v281
          %v317 = vunpack.c.h.b16 %v281
          %v318 = vunpack.c.l.b16 %v282
          %v319 = vunpack.c.h.b16 %v282
          %v320 = vunpack.c.l.b16 %v283
          %v321 = vunpack.c.h.b16 %v283
          %v322 = vunpack.c.l.b16 %v284
          %v323 = vunpack.c.h.b16 %v284
          %v324 = vunpack.c.l.b16 %v285
          %v325 = vunpack.c.h.b16 %v285
          %v326 = vunpack.c.l.b16 %v286
          %v327 = vunpack.c.h.b16 %v286
          %v328 = vunpack.c.l.b16 %v287
          %v329 = vunpack.c.h.b16 %v287
          %v330 = vunpack.c.l.b16 %v288
          %v331 = vunpack.c.h.b16 %v288
          %v332 = vunpack.c.l.b16 %v289
          %v333 = vunpack.c.h.b16 %v289
          %v334 = vunpack.c.l.b16 %v290
          %v335 = vunpack.c.h.b16 %v290
          %v336 = vunpack.c.l.b16 %v291
          %v337 = vunpack.c.h.b16 %v291
          %v338 = vunpack.c.l.b16 %v292
          %v339 = vunpack.c.h.b16 %v292
          %v340 = vunpack.c.l.b16 %v293
          %v341 = vunpack.c.h.b16 %v293
          %v342 = vpack.c.b16 %v312, %v310
          %v343 = vpack.c.b16 %v313, %v311
          %v344 = vpack.c.b16 %v316, %v314
          %v345 = vpack.c.b16 %v317, %v315
          %v346 = vpack.c.b16 %v320, %v318
          %v347 = vpack.c.b16 %v321, %v319
          %v348 = vpack.c.b16 %v324, %v322
          %v349 = vpack.c.b16 %v325, %v323
          %v350 = vpack.c.b16 %v328, %v326
          %v351 = vpack.c.b16 %v329, %v327
          %v352 = vpack.c.b16 %v332, %v330
          %v353 = vpack.c.b16 %v333, %v331
          %v354 = vpack.c.b16 %v336, %v334
          %v355 = vpack.c.b16 %v337, %v335
          %v356 = vpack.c.b16 %v340, %v338
          %v357 = vpack.c.b16 %v341, %v339
          %374 = vmatprep.subr.bf16.mxu0 %v343
          %375 = vmatpush1.bf16.msra.mxu0 %v342
          %376 = vmatprep.subr.bf16.mxu0 %v345
          %377 = vmatpush1.bf16.msra.mxu0 %v344
          %378 = vmatprep.subr.bf16.mxu0 %v347
          %379 = vmatpush1.bf16.msra.mxu0 %v346
          %380 = vmatprep.subr.bf16.mxu0 %v349
          %381 = vmatpush1.bf16.msra.mxu0 %v348
          %382 = vmatprep.subr.bf16.mxu0 %v351
          %383 = vmatpush1.bf16.msra.mxu0 %v350
          %384 = vmatprep.subr.bf16.mxu0 %v353
          %385 = vmatpush1.bf16.msra.mxu0 %v352
          %386 = vmatprep.subr.bf16.mxu0 %v355
          %387 = vmatpush1.bf16.msra.mxu0 %v354
          %388 = vmatprep.subr.bf16.mxu0 %v357
          %389 = vmatpush1.bf16.msra.mxu0 %v356
          %390 = vmatprep.subr.bf16.mxu0 0
          %391 = vmatpush1.bf16.msra.mxu0 0
          %392 = vmatprep.subr.bf16.mxu0 0
          %393 = vmatpush1.bf16.msra.mxu0 0
          %394 = vmatprep.subr.bf16.mxu0 0
          %395 = vmatpush1.bf16.msra.mxu0 0
          %396 = vmatprep.subr.bf16.mxu0 0
          %397 = vmatpush1.bf16.msra.mxu0 0
          %398 = vmatprep.subr.bf16.mxu0 0
          %399 = vmatpush1.bf16.msra.mxu0 0
          %400 = vmatprep.subr.bf16.mxu0 0
          %401 = vmatpush1.bf16.msra.mxu0 0
          %402 = vmatprep.subr.bf16.mxu0 0
          %403 = vmatpush1.bf16.msra.mxu0 0
          %404 = vmatprep.subr.bf16.mxu0 0
          %405 = vmatpush1.bf16.msra.mxu0 0
          %406 = vmatprep.mubr.bf16.mxu0 0
          %407 = vmatmul.mubr.bf16.gmra.mrb[0].mxu0 %v277
          %v408 = vpop.f32.mrb[0].mxu0
          %v409 = vadd.f32 0.0, %v408
          %v410 = vpop.f32.mrb[0].mxu0
          %v411 = vadd.f32 0.0, %v410
          %v412 = vpop.f32.mrb[0].mxu0
          %v413 = vpop.f32.mrb[0].mxu0
          %414 = vdwg.mxu0
          %v415 = vpack.c.bf16 %v409, %v409
          %v416 = vpack.c.bf16 %v411, %v411
          %v419 = vunpack.c.l.b16 %v415
          %v420 = vunpack.c.l.b16 %v416
          %v421 = vpack.c.b16 %v420, %v419
          %423 = vst [vmem:[#allocation2] sm:$0xff] %v421
        $region56: #{tpu_custom_call.1} parent=35 // pred_fallthru
          _
        %v424 = vld [vmem:[%s234] sm:$0xff]
        %v425 = vpack.c.bf16 %v424, %v424
        %v426 = vld [vmem:[#allocation6] sm:$0xf]
        %v427 = vld [vmem:[#allocation6 + $0x4] sm:$0xf]
        %v428 = vld [vmem:[#allocation6 + $0x8] sm:$0xf]
        %v429 = vld [vmem:[#allocation6 + $0xc] sm:$0xf]
        %v430 = vld [vmem:[#allocation6 + $0x10] sm:$0xf]
        %v431 = vld [vmem:[#allocation6 + $0x14] sm:$0xf]
        %v432 = vld [vmem:[#allocation6 + $0x18] sm:$0xf]
        %v433 = vld [vmem:[#allocation6 + $0x1c] sm:$0xf]
        %v434 = vld [vmem:[#allocation6 + $0x20] sm:$0xf]
        %v435 = vld [vmem:[#allocation6 + $0x24] sm:$0xf]
        %v436 = vld [vmem:[#allocation6 + $0x28] sm:$0xf]
        %v437 = vld [vmem:[#allocation6 + $0x2c] sm:$0xf]
        %v438 = vld [vmem:[#allocation6 + $0x30] sm:$0xf]
        %v439 = vld [vmem:[#allocation6 + $0x34] sm:$0xf]
        %v440 = vld [vmem:[#allocation6 + $0x38] sm:$0xf]
        %v441 = vld [vmem:[#allocation6 + $0x3c] sm:$0xf]
        %v458 = vunpack.c.l.b16 %v426
        %v459 = vunpack.c.l.b16 %v427
        %v460 = vunpack.c.l.b16 %v428
        %v461 = vunpack.c.l.b16 %v429
        %v462 = vunpack.c.l.b16 %v430
        %v463 = vunpack.c.l.b16 %v431
        %v464 = vunpack.c.l.b16 %v432
        %v465 = vunpack.c.l.b16 %v433
        %v466 = vunpack.c.l.b16 %v434
        %v467 = vunpack.c.l.b16 %v435
        %v468 = vunpack.c.l.b16 %v436
        %v469 = vunpack.c.l.b16 %v437
        %v470 = vunpack.c.l.b16 %v438
        %v471 = vunpack.c.l.b16 %v439
        %v472 = vunpack.c.l.b16 %v440
        %v473 = vunpack.c.l.b16 %v441
        %v474 = vpack.c.b16 %v459, %v458
        %v475 = vpack.c.b16 %v461, %v460
        %v476 = vpack.c.b16 %v463, %v462
        %v477 = vpack.c.b16 %v465, %v464
        %v478 = vpack.c.b16 %v467, %v466
        %v479 = vpack.c.b16 %v469, %v468
        %v480 = vpack.c.b16 %v471, %v470
        %v481 = vpack.c.b16 %v473, %v472
        %490 = vmatprep.subr.bf16.mxu0 0
        %491 = vmatpush1.bf16.msra.mxu0 %v474
        %492 = vmatprep.subr.bf16.mxu0 0
        %493 = vmatpush1.bf16.msra.mxu0 %v475
        %494 = vmatprep.subr.bf16.mxu0 0
        %495 = vmatpush1.bf16.msra.mxu0 %v476
        %496 = vmatprep.subr.bf16.mxu0 0
        %497 = vmatpush1.bf16.msra.mxu0 %v477
        %498 = vmatprep.subr.bf16.mxu0 0
        %499 = vmatpush1.bf16.msra.mxu0 %v478
        %500 = vmatprep.subr.bf16.mxu0 0
        %501 = vmatpush1.bf16.msra.mxu0 %v479
        %502 = vmatprep.subr.bf16.mxu0 0
        %503 = vmatpush1.bf16.msra.mxu0 %v480
        %504 = vmatprep.subr.bf16.mxu0 0
        %505 = vmatpush1.bf16.msra.mxu0 %v481
        %506 = vmatprep.subr.bf16.mxu0 0
        %507 = vmatpush1.bf16.msra.mxu0 0
        %508 = vmatprep.subr.bf16.mxu0 0
        %509 = vmatpush1.bf16.msra.mxu0 0
        %510 = vmatprep.subr.bf16.mxu0 0
        %511 = vmatpush1.bf16.msra.mxu0 0
        %512 = vmatprep.subr.bf16.mxu0 0
        %513 = vmatpush1.bf16.msra.mxu0 0
        %514 = vmatprep.subr.bf16.mxu0 0
        %515 = vmatpush1.bf16.msra.mxu0 0
        %516 = vmatprep.subr.bf16.mxu0 0
        %517 = vmatpush1.bf16.msra.mxu0 0
        %518 = vmatprep.subr.bf16.mxu0 0
        %519 = vmatpush1.bf16.msra.mxu0 0
        %520 = vmatprep.subr.bf16.mxu0 0
        %521 = vmatpush1.bf16.msra.mxu0 0
        %522 = vmatprep.mubr.bf16.mxu0 0
        %523 = vmatmul.mubr.bf16.gmra.mrb[0].mxu0 %v425
        %v524 = vpop.f32.mrb[0].mxu0
        %v525 = vadd.f32 0.0, %v524
        %v526 = vpop.f32.mrb[0].mxu0
        %v527 = vpop.f32.mrb[0].mxu0
        %v528 = vpop.f32.mrb[0].mxu0
        %529 = vdwg.mxu0
        %v530 = vld [vmem:[#allocation2] sm:$0xf]
        %v531 = vld [vmem:[#allocation2 + $0x4] sm:$0xf]
        %v532 = vpack.c.bf16 %v525, %v525
        %533 = vmatprep.subr.bf16.mxu0 0
        %534 = vmatpush1.bf16.xpose.msra.mxu0 %v530
        %535 = vmatprep.subr.bf16.mxu0 0
        %536 = vmatpush1.bf16.xpose.msra.mxu0 0
        %537 = vmatprep.subr.bf16.mxu0 0
        %538 = vmatpush1.bf16.xpose.msra.mxu0 0
        %539 = vmatprep.subr.bf16.mxu0 0
        %540 = vmatpush1.bf16.xpose.msra.mxu0 0
        %541 = vmatprep.subr.bf16.mxu0 0
        %542 = vmatpush1.bf16.xpose.msra.mxu0 0
        %543 = vmatprep.subr.bf16.mxu0 0
        %544 = vmatpush1.bf16.xpose.msra.mxu0 0
        %545 = vmatprep.subr.bf16.mxu0 0
        %546 = vmatpush1.bf16.xpose.msra.mxu0 0
        %547 = vmatprep.subr.bf16.mxu0 0
        %548 = vmatpush1.bf16.xpose.msra.mxu0 0
        %549 = vmatprep.subr.bf16.mxu0 0
        %550 = vmatpush1.bf16.xpose.msra.mxu0 0
        %551 = vmatprep.subr.bf16.mxu0 0
        %552 = vmatpush1.bf16.xpose.msra.mxu0 0
        %553 = vmatprep.subr.bf16.mxu0 0
        %554 = vmatpush1.bf16.xpose.msra.mxu0 0
        %555 = vmatprep.subr.bf16.mxu0 0
        %556 = vmatpush1.bf16.xpose.msra.mxu0 0
        %557 = vmatprep.subr.bf16.mxu0 0
        %558 = vmatpush1.bf16.xpose.msra.mxu0 0
        %559 = vmatprep.subr.bf16.mxu0 0
        %560 = vmatpush1.bf16.xpose.msra.mxu0 0
        %561 = vmatprep.subr.bf16.mxu0 0
        %562 = vmatpush1.bf16.xpose.msra.mxu0 0
        %563 = vmatprep.subr.bf16.mxu0 0
        %564 = vmatpush1.bf16.xpose.msra.mxu0 0
        %565 = vmatprep.mubr.bf16.mxu0 0
        %566 = vmatmul.mubr.bf16.gmra.mrb[0].mxu0 %v532
        %v567 = vpop.f32.mrb[0].mxu0
        %v568 = vadd.f32 0.0, %v567
        %v569 = vpop.f32.mrb[0].mxu0
        %v570 = vpop.f32.mrb[0].mxu0
        %v571 = vpop.f32.mrb[0].mxu0
        %572 = vdwg.mxu0
        %vm573 = vcmask 64512
        %v574 = vsel %vm573, %v568, -inf
        %575 = vmax.xlane.f32.xlu0 %v574
        %v576 = vpop.xlane.xlu0 %575
        %v577 = vsub.f32 %v568, %v576
        %v578 = vmul.f32 %v577, 1.442695
        %v579 = vpow.pop %v578
        %v580 = vsel %vm573, %v579, 0.0
        %581 = vadd.xlane.f32.xlu0 %v580
        %v582 = vpop.xlane.xlu0 %581
        %v583 = vrcp.pop %v582
        %v584 = vmul.f32 %v579, %v583
        %v585 = vpack.c.bf16 %v584, %v584
        %v587 = vsel %vm573, %v585, 0
        %vm589 = vcmask 1043456
        %v591 = vsel %vm589, %v531, 0
        %593 = vmatprep.subr.bf16.mxu0 0
        %594 = vmatpush1.bf16.msra.mxu0 %v591
        %595 = vmatprep.subr.bf16.mxu0 0
        %596 = vmatpush1.bf16.msra.mxu0 0
        %597 = vmatprep.subr.bf16.mxu0 0
        %598 = vmatpush1.bf16.msra.mxu0 0
        %599 = vmatprep.subr.bf16.mxu0 0
        %600 = vmatpush1.bf16.msra.mxu0 0
        %601 = vmatprep.subr.bf16.mxu0 0
        %602 = vmatpush1.bf16.msra.mxu0 0
        %603 = vmatprep.subr.bf16.mxu0 0
        %604 = vmatpush1.bf16.msra.mxu0 0
        %605 = vmatprep.subr.bf16.mxu0 0
        %606 = vmatpush1.bf16.msra.mxu0 0
        %607 = vmatprep.subr.bf16.mxu0 0
        %608 = vmatpush1.bf16.msra.mxu0 0
        %609 = vmatprep.subr.bf16.mxu0 0
        %610 = vmatpush1.bf16.msra.mxu0 0
        %611 = vmatprep.subr.bf16.mxu0 0
        %612 = vmatpush1.bf16.msra.mxu0 0
        %613 = vmatprep.subr.bf16.mxu0 0
        %614 = vmatpush1.bf16.msra.mxu0 0
        %615 = vmatprep.subr.bf16.mxu0 0
        %616 = vmatpush1.bf16.msra.mxu0 0
        %617 = vmatprep.subr.bf16.mxu0 0
        %618 = vmatpush1.bf16.msra.mxu0 0
        %619 = vmatprep.subr.bf16.mxu0 0
        %620 = vmatpush1.bf16.msra.mxu0 0
        %621 = vmatprep.subr.bf16.mxu0 0
        %622 = vmatpush1.bf16.msra.mxu0 0
        %623 = vmatprep.subr.bf16.mxu0 0
        %624 = vmatpush1.bf16.msra.mxu0 0
        %625 = vmatprep.mubr.bf16.mxu0 0
        %626 = vmatmul.mubr.bf16.gmra.mrb[0].mxu0 %v587
        %v627 = vpop.f32.mrb[0].mxu0
        %v628 = vadd.f32 0.0, %v627
        %v629 = vpop.f32.mrb[0].mxu0
        %v630 = vpop.f32.mrb[0].mxu0
        %v631 = vpop.f32.mrb[0].mxu0
        %632 = vdwg.mxu0
        %v633 = vpack.c.bf16 %v628, %v628
        %v634 = vld [vmem:[#allocation9] sm:$0xf]
        %v635 = vld [vmem:[#allocation9 + $0x4] sm:$0xf]
        %v636 = vld [vmem:[#allocation9 + $0x8] sm:$0xf]
        %v637 = vld [vmem:[#allocation9 + $0xc] sm:$0xf]
        %v638 = vld [vmem:[#allocation9 + $0x10] sm:$0xf]
        %v639 = vld [vmem:[#allocation9 + $0x14] sm:$0xf]
        %v640 = vld [vmem:[#allocation9 + $0x18] sm:$0xf]
        %v641 = vld [vmem:[#allocation9 + $0x1c] sm:$0xf]
        %v642 = vld [vmem:[#allocation9 + $0x20] sm:$0xf]
        %v643 = vld [vmem:[#allocation9 + $0x24] sm:$0xf]
        %v644 = vld [vmem:[#allocation9 + $0x28] sm:$0xf]
        %v645 = vld [vmem:[#allocation9 + $0x2c] sm:$0xf]
        %v646 = vld [vmem:[#allocation9 + $0x30] sm:$0xf]
        %v647 = vld [vmem:[#allocation9 + $0x34] sm:$0xf]
        %v648 = vld [vmem:[#allocation9 + $0x38] sm:$0xf]
        %v649 = vld [vmem:[#allocation9 + $0x3c] sm:$0xf]
        %v666 = vunpack.c.l.b16 %v634
        %v667 = vunpack.c.l.b16 %v635
        %v668 = vunpack.c.l.b16 %v636
        %v669 = vunpack.c.l.b16 %v637
        %v670 = vunpack.c.l.b16 %v638
        %v671 = vunpack.c.l.b16 %v639
        %v672 = vunpack.c.l.b16 %v640
        %v673 = vunpack.c.l.b16 %v641
        %v674 = vunpack.c.l.b16 %v642
        %v675 = vunpack.c.l.b16 %v643
        %v676 = vunpack.c.l.b16 %v644
        %v677 = vunpack.c.l.b16 %v645
        %v678 = vunpack.c.l.b16 %v646
        %v679 = vunpack.c.l.b16 %v647
        %v680 = vunpack.c.l.b16 %v648
        %v681 = vunpack.c.l.b16 %v649
        %v682 = vpack.c.b16 %v667, %v666
        %v683 = vpack.c.b16 %v669, %v668
        %v684 = vpack.c.b16 %v671, %v670
        %v685 = vpack.c.b16 %v673, %v672
        %v686 = vpack.c.b16 %v675, %v674
        %v687 = vpack.c.b16 %v677, %v676
        %v688 = vpack.c.b16 %v679, %v678
        %v689 = vpack.c.b16 %v681, %v680
        %698 = vmatprep.subr.bf16.mxu0 0
        %699 = vmatpush1.bf16.msra.mxu0 %v682
        %700 = vmatprep.subr.bf16.mxu0 0
        %701 = vmatpush1.bf16.msra.mxu0 %v683
        %702 = vmatprep.subr.bf16.mxu0 0
        %703 = vmatpush1.bf16.msra.mxu0 %v684
        %704 = vmatprep.subr.bf16.mxu0 0
        %705 = vmatpush1.bf16.msra.mxu0 %v685
        %706 = vmatprep.subr.bf16.mxu0 0
        %707 = vmatpush1.bf16.msra.mxu0 %v686
        %708 = vmatprep.subr.bf16.mxu0 0
        %709 = vmatpush1.bf16.msra.mxu0 %v687
        %710 = vmatprep.subr.bf16.mxu0 0
        %711 = vmatpush1.bf16.msra.mxu0 %v688
        %712 = vmatprep.subr.bf16.mxu0 0
        %713 = vmatpush1.bf16.msra.mxu0 %v689
        %714 = vmatprep.subr.bf16.mxu0 0
        %715 = vmatpush1.bf16.msra.mxu0 0
        %716 = vmatprep.subr.bf16.mxu0 0
        %717 = vmatpush1.bf16.msra.mxu0 0
        %718 = vmatprep.subr.bf16.mxu0 0
        %719 = vmatpush1.bf16.msra.mxu0 0
        %720 = vmatprep.subr.bf16.mxu0 0
        %721 = vmatpush1.bf16.msra.mxu0 0
        %722 = vmatprep.subr.bf16.mxu0 0
        %723 = vmatpush1.bf16.msra.mxu0 0
        %724 = vmatprep.subr.bf16.mxu0 0
        %725 = vmatpush1.bf16.msra.mxu0 0
        %726 = vmatprep.subr.bf16.mxu0 0
        %727 = vmatpush1.bf16.msra.mxu0 0
        %728 = vmatprep.subr.bf16.mxu0 0
        %729 = vmatpush1.bf16.msra.mxu0 0
        %730 = vmatprep.mubr.bf16.mxu0 0
        %731 = vmatmul.mubr.bf16.gmra.mrb[0].mxu0 %v633
        %v732 = vpop.f32.mrb[0].mxu0
        %v733 = vadd.f32 %v424, %v732
        %v734 = vpop.f32.mrb[0].mxu0
        %v735 = vpop.f32.mrb[0].mxu0
        %v736 = vpop.f32.mrb[0].mxu0
        %737 = vdwg.mxu0
        %738 = vadd.xlane.f32.xlu0 %v733
        %v739 = vpop.xlane.xlu0 %738
        %v740 = vmul.f32 %v739, 0.03125
        %v741 = vsub.f32 %v733, %v740
        %v742 = vlaneseq
        %v743 = vand.u32 %v742, 127
        %vm744 = vcmp.lt.s32.totalorder %v743, 32
        %v745 = vsel %vm744, %v741, 0.0
        %v746 = vmul.f32 %v745, %v745
        %747 = vadd.xlane.f32.xlu0 %v746
        %v748 = vpop.xlane.xlu0 %747
        %v749 = vmul.f32 %v748, 0.03125
        %v750 = vadd.f32 %v749, 1e-05
        %v751 = vrsqrt.pop %v750
        %v752 = vmul.f32 %v745, %v751
        %753 = vst [vmem:[%s270] sm:$0xff] %v752
        %s754 = sand.u32 %s134, 1
        %s755 = scalar_lea.sflag [#allocation5], %s754
        %s756 = sand.u32 %s134, 1
        %s757 = smul.addr %s756, 8
        %s758 = scalar_lea.vmem [#allocation11], %s757
        // Predicated region
        $region57: #{tpu_custom_call.1} parent=35 // pred_check
          %p759 = pneg %p144
        $region58: #{tpu_custom_call.1} parent=35 // pred_check_branch
          %761 = sbr.rel (%p759) target = $region60
        $region59: #{tpu_custom_call.1} parent=35 // pred_region
          %s763 = ssub.s32 128, 128
          %764 = vsyncadd %s755, %s763
          %s765 = sadd.s32 %s28, %s27
          %s766 = smul.addr %s765, 128
          %s767 = scalar_lea.hbm %s4, %s766
          %s769 = sshll.u32 %s758, 4
          %s770 = int_to_ptr.vmem [resolvable:$true] %s769
          %772 = dma.vmem_to_hbm [thread:$0]  %s770, 128, %s767, %s755
        $region60: #{tpu_custom_call.1} parent=35 // pred_fallthru
          _
      $region36: #{tpu_custom_call.1} parent=5 // pred_fallthru
        _
      %p773 = scmp.le.s32.totalorder 2, %s18
      // Predicated region
      $region61: #{tpu_custom_call.1} parent=5 // pred_check
        %p774 = pneg %p773
      $region62: #{tpu_custom_call.1} parent=5 // pred_check_branch
        %776 = sbr.rel (%p774) target = $region64
      $region63: #{tpu_custom_call.1} parent=5 // pred_region
        %s777 = ssub.s32 %s18, 2
        // Predicated region
        $region65: #{tpu_custom_call.1} parent=63 // pred_check
          %p778 = pneg %p150
        $region66: #{tpu_custom_call.1} parent=63 // pred_check_branch
          %780 = sbr.rel (%p778) target = $region68
        $region67: #{tpu_custom_call.1} parent=63 // pred_region
          %s781 = sand.u32 %s135, 1
          %s782 = scalar_lea.sflag [#allocation5], %s781
          %s783 = sand.u32 %s135, 1
          %s784 = smul.addr %s783, 8
          %s785 = scalar_lea.vmem [#allocation11], %s784
          %786 = dma.done %s782, 128
        $region68: #{tpu_custom_call.1} parent=63 // pred_fallthru
          _
      $region64: #{tpu_custom_call.1} parent=5 // pred_fallthru
        _
    $region6: #{tpu_custom_call.1} parent=1 // loop_footer
      %s22 = sadd.s32 1, %s18
    $region7: #{tpu_custom_call.1} parent=1 // loop_footer_branch
      %17 = sbr.rel target = $region3
    $region8: #{tpu_custom_call.1} parent=1 // loop_exit
      _
    %787 = vsyncpa [#allocation4], 1
    %s788 = scalar_lea.sflag [#allocation4], 1
    %789 = vsyncpa %s788, 1
    %790 = vsyncpa [#allocation7], 1
    %791 = vsyncpa [#allocation10], 1
    %792 = vsyncpa [#allocation5], 1
    %s793 = scalar_lea.sflag [#allocation5], 1
    %794 = vsyncpa %s793, 1

</llo_original>
